<compile_context>
chip_gen: v7x
topology: tpu7x:2x2x1
jax: 0.10.0
libtpu: 0.0.40
codegen_flags: <defaults>
</compile_context>

<pallas_src>
import math

import jax
import jax.numpy as jnp
from jax.experimental import pallas as pl
from jax.experimental.pallas import tpu as pltpu

N_DIM = 3
N_STEPS = 200
TIME_EMBED_DIM = 128
HIDDEN_DIM = 256
X_PAD = 16                 # pad the 3 data features (bf16 sublane-tile friendly)
D_OUT_PAD = 128            # lane-dense output width (true outputs in cols [:3])
LN_EPS = 1e-5
MAX_TILE_B = 512           # batch-tile cap (sweepable); ~1.5 MiB VMEM per step


def _round_up(x, m):
    return ((x + m - 1) // m) * m


N_STEPS_PAD = _round_up(N_STEPS, 128)      # 256: one-hot width / table rows


def _ln_relu(h, gamma, beta):
    """Single-pass LayerNorm (f32) fused with ReLU.

    E[x^2] - mean^2 keeps the two cross-lane reductions independent (they can
    overlap on the XLU) instead of three serialized traversals.
    TODO(synk): if profiling shows the XLU saturating, move the row sums onto
    the MXU via a dot with a resident ones matrix (verify bf16 numerics first).
    """
    mu = jnp.mean(h, axis=-1, keepdims=True)
    ms = jnp.mean(h * h, axis=-1, keepdims=True)
    var = jnp.maximum(ms - mu * mu, 0.0)
    y = (h - mu) * jax.lax.rsqrt(var + LN_EPS) * gamma + beta
    return jnp.maximum(y, 0.0)


def ddpm_mlp_kernel(x_ref, t_ref,
                    w1a_ref, w1b_ref, w2_ref, w3_ref, w4_ref,
                    tbl_ref, vec_ref, o_ref):
    vec = vec_ref[...]                                   # (16, 256) packed f32
    b1, g1, be1 = vec[0], vec[1], vec[2]
    b2, g2, be2 = vec[3], vec[4], vec[5]
    b3, g3, be3 = vec[6], vec[7], vec[8]
    b4 = vec[9, :D_OUT_PAD]

    tb = x_ref.shape[0]
    x = x_ref[...]                                       # (tb, 16) bf16
    t = t_ref[...]                                       # (tb, 1)  int32

    # Fused sinusoidal time embedding: one-hot(t) @ table on the MXU.  Table
    # rows are bf16(sin/cos embedding), so with f32 accumulation `temb` is
    # bit-identical to casting the reference embedding to bf16.
    lane = jax.lax.broadcasted_iota(jnp.int32, (tb, N_STEPS_PAD), 1)
    onehot = jnp.where(lane == t, 1.0, 0.0).astype(jnp.bfloat16)
    temb = jnp.dot(onehot, tbl_ref[...],
                   preferred_element_type=jnp.float32).astype(jnp.bfloat16)

    # Layer 1: split matmul (K=16 + K=128) avoids padding K from 131 to 256
    # and avoids any in-kernel concat.
    h = (jnp.dot(x, w1a_ref[...], preferred_element_type=jnp.float32)
         + jnp.dot(temb, w1b_ref[...], preferred_element_type=jnp.float32)
         + b1)
    h = _ln_relu(h, g1, be1)
    h = jnp.dot(h.astype(jnp.bfloat16), w2_ref[...],
                preferred_element_type=jnp.float32) + b2
    h = _ln_relu(h, g2, be2)
    h = jnp.dot(h.astype(jnp.bfloat16), w3_ref[...],
                preferred_element_type=jnp.float32) + b3
    h = _ln_relu(h, g3, be3)
    o_ref[...] = jnp.dot(h.astype(jnp.bfloat16), w4_ref[...],
                         preferred_element_type=jnp.float32) + b4


def init_params(key):
    """PyTorch-default-style deterministic init (uniform +-1/sqrt(fan_in))."""
    shapes = [(N_DIM + TIME_EMBED_DIM, HIDDEN_DIM), (HIDDEN_DIM, HIDDEN_DIM),
              (HIDDEN_DIM, HIDDEN_DIM), (HIDDEN_DIM, N_DIM)]
    keys = jax.random.split(key, 2 * len(shapes))
    params = {}
    for i, (fan_in, fan_out) in enumerate(shapes):
        bound = 1.0 / math.sqrt(fan_in)
        params[f"w{i + 1}"] = jax.random.uniform(
            keys[2 * i], (fan_in, fan_out), jnp.float32, -bound, bound)
        params[f"b{i + 1}"] = jax.random.uniform(
            keys[2 * i + 1], (fan_out,), jnp.float32, -bound, bound)
    for i in range(1, 4):
        params[f"g{i}"] = jnp.ones((HIDDEN_DIM,), jnp.float32)
        params[f"be{i}"] = jnp.zeros((HIDDEN_DIM,), jnp.float32)
    return params


def time_embedding(t):
    """Sinusoidal time embedding, identical to the PyTorch forward."""
    half = TIME_EMBED_DIM // 2
    scale = math.log(10000.0) / (half - 1)
    freqs = jnp.exp(jnp.arange(half, dtype=jnp.float32) * -scale)
    args = t.astype(jnp.float32)[:, None] * freqs[None, :]
    return jnp.concatenate([jnp.sin(args), jnp.cos(args)], axis=-1)


def _prep_constants(params):
    """bf16 weights + bf16 embedding table + packed f32 bias/LN vectors."""
    w1 = params["w1"]                                            # (131, 256)
    w1a = jnp.pad(w1[:N_DIM], ((0, X_PAD - N_DIM), (0, 0))).astype(jnp.bfloat16)
    w1b = w1[N_DIM:].astype(jnp.bfloat16)                        # (128, 256)
    w2 = params["w2"].astype(jnp.bfloat16)
    w3 = params["w3"].astype(jnp.bfloat16)
    w4 = jnp.pad(params["w4"],
                 ((0, 0), (0, D_OUT_PAD - N_DIM))).astype(jnp.bfloat16)
    b4 = jnp.pad(params["b4"], ((0, HIDDEN_DIM - N_DIM),))
    rows = jnp.stack([params["b1"], params["g1"], params["be1"],
                      params["b2"], params["g2"], params["be2"],
                      params["b3"], params["g3"], params["be3"], b4])
    vec = jnp.zeros((16, HIDDEN_DIM), jnp.float32).at[:10].set(rows)
    tbl = time_embedding(jnp.arange(N_STEPS, dtype=jnp.int32))   # (200, 128)
    tbl = jnp.pad(tbl, ((0, N_STEPS_PAD - N_STEPS), (0, 0))).astype(jnp.bfloat16)
    return w1a, w1b, w2, w3, w4, tbl, vec


def ddpm_forward(params, x, t):
    B = x.shape[0]
    # Activations streamed as bf16 (x) + int32 (t); embedding built in-kernel.
    x16 = jnp.pad(x, ((0, 0), (0, X_PAD - N_DIM))).astype(jnp.bfloat16)
    t2 = t.astype(jnp.int32).reshape(B, 1)

    # Batch tiling: split into >= 2 tiles when B > 8 so the "parallel" grid
    # axis shards across v7x's 2 TensorCores; cap the tile at MAX_TILE_B.
    if B <= 8:
        tb = 8
    else:
        tb = min(MAX_TILE_B, _round_up(pl.cdiv(B, 2), 8))
    b_pad = _round_up(B, tb)
    if b_pad != B:
        x16 = jnp.pad(x16, ((0, b_pad - B), (0, 0)))
        t2 = jnp.pad(t2, ((0, b_pad - B), (0, 0)))
    grid = (b_pad // tb,)

    w1a, w1b, w2, w3, w4, tbl, vec = _prep_constants(params)

    def resident(shape):
        # Constant index_map -> block stays VMEM-resident across batch tiles.
        # (pipeline_mode=pl.Buffered(1) would drop the dead second buffer;
        #  skipped since VMEM headroom is ample at these sizes.)
        return pl.BlockSpec(shape, lambda i: (0, 0))

    out = pl.pallas_call(
        ddpm_mlp_kernel,
        out_shape=jax.ShapeDtypeStruct((b_pad, D_OUT_PAD), jnp.float32),
        grid_spec=pltpu.PrefetchScalarGridSpec(
            num_scalar_prefetch=0,
            grid=grid,
            in_specs=[
                pl.BlockSpec((tb, X_PAD), lambda i: (i, 0)),
                pl.BlockSpec((tb, 1), lambda i: (i, 0)),
                resident(w1a.shape), resident(w1b.shape),
                resident(w2.shape), resident(w3.shape), resident(w4.shape),
                resident(tbl.shape), resident(vec.shape),
            ],
            out_specs=pl.BlockSpec((tb, D_OUT_PAD), lambda i: (i, 0)),
        ),
        compiler_params=pltpu.CompilerParams(
            dimension_semantics=("parallel",)),
    )(x16, t2, w1a, w1b, w2, w3, w4, tbl, vec)

    return out[:B, :N_DIM]


# ----------------------------- references ----------------------------------
def _ln(h, gamma, beta):
    mu = jnp.mean(h, axis=-1, keepdims=True)
    var = jnp.mean((h - mu) ** 2, axis=-1, keepdims=True)
    return (h - mu) * jax.lax.rsqrt(var + LN_EPS) * gamma + beta


def ddpm_forward_ref_f32(params, x, t):
    """Pure-f32 JAX reference mirroring the PyTorch module exactly."""
    h = jnp.concatenate([x, time_embedding(t)], axis=1)
    h = h @ params["w1"] + params["b1"]
    h = jnp.maximum(_ln(h, params["g1"], params["be1"]), 0.0)
    h = h @ params["w2"] + params["b2"]
    h = jnp.maximum(_ln(h, params["g2"], params["be2"]), 0.0)
    h = h @ params["w3"] + params["b3"]
    h = jnp.maximum(_ln(h, params["g3"], params["be3"]), 0.0)
    return h @ params["w4"] + params["b4"]


def ddpm_forward_ref_policy(params, x, t):
    """Reference using the kernel's precision policy (bf16 dots, f32 acc/LN)."""
    def dot(a, w):
        return jnp.dot(a.astype(jnp.bfloat16), w.astype(jnp.bfloat16),
                       preferred_element_type=jnp.float32)
    h = jnp.concatenate([x, time_embedding(t)], axis=1)
    h = dot(h, params["w1"]) + params["b1"]
    h = jnp.maximum(_ln(h, params["g1"], params["be1"]), 0.0)
    h = dot(h, params["w2"]) + params["b2"]
    h = jnp.maximum(_ln(h, params["g2"], params["be2"]), 0.0)
    h = dot(h, params["w3"]) + params["b3"]
    h = jnp.maximum(_ln(h, params["g3"], params["be3"]), 0.0)
    return dot(h, params["w4"]) + params["b4"]


if __name__ == "__main__":
    key = jax.random.PRNGKey(0)
    kp, kx, kt = jax.random.split(key, 3)
    params = init_params(kp)

    fwd = jax.jit(ddpm_forward)

    # Small demo batch plus a larger batch that exercises the multi-tile grid
    # (grid=(2,) at B=512, sharded across TensorCores on v7x).
    for B in (8, 512):
        kxb, ktb = jax.random.split(jax.random.fold_in(kx, B), 2)
        x = jax.random.normal(kxb, (B, N_DIM), jnp.float32)
        t = jax.random.randint(ktb, (B,), 0, N_STEPS, jnp.int32)

        out = jax.block_until_ready(fwd(params, x, t))
        assert out.shape == (B, N_DIM), out.shape

        ref_pol = ddpm_forward_ref_policy(params, x, t)   # same precision policy
        ref_f32 = ddpm_forward_ref_f32(params, x, t)      # PyTorch-faithful f32
        err_pol = float(jnp.max(jnp.abs(out - ref_pol)))
        err_f32 = float(jnp.max(jnp.abs(out - ref_f32)))
        assert err_pol < 2e-3, (B, err_pol)               # kernel correctness
        assert err_f32 < 1.5e-1, (B, err_f32)             # bf16-policy sanity

    print("KERNEL_OK")
</pallas_src>

<mosaic_0001>
module attributes {stable_mosaic.version = 11 : i64} {
  func.func @ddpm_mlp_kernel(%arg0: i32, %arg1: memref<8x16xbf16, #tpu.memory_space<vmem>>, %arg2: memref<8x1xi32, #tpu.memory_space<vmem>>, %arg3: memref<16x256xbf16, #tpu.memory_space<vmem>>, %arg4: memref<128x256xbf16, #tpu.memory_space<vmem>>, %arg5: memref<256x256xbf16, #tpu.memory_space<vmem>>, %arg6: memref<256x256xbf16, #tpu.memory_space<vmem>>, %arg7: memref<256x128xbf16, #tpu.memory_space<vmem>>, %arg8: memref<256x128xbf16, #tpu.memory_space<vmem>>, %arg9: memref<16x256xf32, #tpu.memory_space<vmem>>, %arg10: memref<8x128xf32, #tpu.memory_space<vmem>>) attributes {dimension_semantics = [#tpu.dimension_semantics<parallel>], iteration_bounds = array<i64: 1>, scalar_prefetch = 0 : i64, scratch_operands = 0 : i64, tpu.core_type = #tpu.core_type<tc>, window_params = [{transform_indices = @transform_0, window_bounds = array<i64: 8, 16>}, {transform_indices = @transform_1, window_bounds = array<i64: 8, 1>}, {pipeline_mode = #tpu.pipeline_mode<synchronous>, transform_indices = @transform_2, window_bounds = array<i64: 16, 256>}, {pipeline_mode = #tpu.pipeline_mode<synchronous>, transform_indices = @transform_3, window_bounds = array<i64: 128, 256>}, {pipeline_mode = #tpu.pipeline_mode<synchronous>, transform_indices = @transform_4, window_bounds = array<i64: 256, 256>}, {pipeline_mode = #tpu.pipeline_mode<synchronous>, transform_indices = @transform_5, window_bounds = array<i64: 256, 256>}, {pipeline_mode = #tpu.pipeline_mode<synchronous>, transform_indices = @transform_6, window_bounds = array<i64: 256, 128>}, {pipeline_mode = #tpu.pipeline_mode<synchronous>, transform_indices = @transform_7, window_bounds = array<i64: 256, 128>}, {pipeline_mode = #tpu.pipeline_mode<synchronous>, transform_indices = @transform_8, window_bounds = array<i64: 16, 256>}, {transform_indices = @transform_9, window_bounds = array<i64: 8, 128>}]} {
    %c0 = arith.constant 0 : index
    %c0_0 = arith.constant 0 : index
    %0 = vector.load %arg9[%c0, %c0_0] : memref<16x256xf32, #tpu.memory_space<vmem>>, vector<16x256xf32>
    %1 = vector.extract_strided_slice %0 {offsets = [0, 0], sizes = [1, 256], strides = [1, 1]} : vector<16x256xf32> to vector<1x256xf32>
    %2 = vector.shape_cast %1 : vector<1x256xf32> to vector<256xf32>
    %3 = vector.extract_strided_slice %0 {offsets = [1, 0], sizes = [1, 256], strides = [1, 1]} : vector<16x256xf32> to vector<1x256xf32>
    %4 = vector.shape_cast %3 : vector<1x256xf32> to vector<256xf32>
    %5 = vector.extract_strided_slice %0 {offsets = [2, 0], sizes = [1, 256], strides = [1, 1]} : vector<16x256xf32> to vector<1x256xf32>
    %6 = vector.shape_cast %5 : vector<1x256xf32> to vector<256xf32>
    %7 = vector.extract_strided_slice %0 {offsets = [3, 0], sizes = [1, 256], strides = [1, 1]} : vector<16x256xf32> to vector<1x256xf32>
    %8 = vector.shape_cast %7 : vector<1x256xf32> to vector<256xf32>
    %9 = vector.extract_strided_slice %0 {offsets = [4, 0], sizes = [1, 256], strides = [1, 1]} : vector<16x256xf32> to vector<1x256xf32>
    %10 = vector.shape_cast %9 : vector<1x256xf32> to vector<256xf32>
    %11 = vector.extract_strided_slice %0 {offsets = [5, 0], sizes = [1, 256], strides = [1, 1]} : vector<16x256xf32> to vector<1x256xf32>
    %12 = vector.shape_cast %11 : vector<1x256xf32> to vector<256xf32>
    %13 = vector.extract_strided_slice %0 {offsets = [6, 0], sizes = [1, 256], strides = [1, 1]} : vector<16x256xf32> to vector<1x256xf32>
    %14 = vector.shape_cast %13 : vector<1x256xf32> to vector<256xf32>
    %15 = vector.extract_strided_slice %0 {offsets = [7, 0], sizes = [1, 256], strides = [1, 1]} : vector<16x256xf32> to vector<1x256xf32>
    %16 = vector.shape_cast %15 : vector<1x256xf32> to vector<256xf32>
    %17 = vector.extract_strided_slice %0 {offsets = [8, 0], sizes = [1, 256], strides = [1, 1]} : vector<16x256xf32> to vector<1x256xf32>
    %18 = vector.shape_cast %17 : vector<1x256xf32> to vector<256xf32>
    %19 = vector.extract_strided_slice %0 {offsets = [9, 0], sizes = [1, 128], strides = [1, 1]} : vector<16x256xf32> to vector<1x128xf32>
    %20 = vector.shape_cast %19 : vector<1x128xf32> to vector<128xf32>
    %c0_1 = arith.constant 0 : index
    %c0_2 = arith.constant 0 : index
    %21 = vector.load %arg1[%c0_1, %c0_2] : memref<8x16xbf16, #tpu.memory_space<vmem>>, vector<8x16xbf16>
    %c0_3 = arith.constant 0 : index
    %c0_4 = arith.constant 0 : index
    %22 = vector.load %arg2[%c0_3, %c0_4] : memref<8x1xi32, #tpu.memory_space<vmem>>, vector<8x1xi32>
    %23 = tpu.iota {dimensions = array<i32: 1>} : vector<8x256xi32>
    %24 = vector.broadcast %22 : vector<8x1xi32> to vector<8x256xi32>
    %25 = arith.cmpi eq, %23, %24 : vector<8x256xi32>
    %cst = arith.constant 1.000000e+00 : f32
    %cst_5 = arith.constant 0.000000e+00 : f32
    %26 = vector.broadcast %cst : f32 to vector<8x256xf32>
    %27 = vector.broadcast %cst_5 : f32 to vector<8x256xf32>
    %28 = arith.select %25, %26, %27 : vector<8x256xi1>, vector<8x256xf32>
    %29 = arith.truncf %28 : vector<8x256xf32> to vector<8x256xbf16>
    %c0_6 = arith.constant 0 : index
    %c0_7 = arith.constant 0 : index
    %30 = vector.load %arg8[%c0_6, %c0_7] : memref<256x128xbf16, #tpu.memory_space<vmem>>, vector<256x128xbf16>
    %cst_8 = arith.constant dense<0.000000e+00> : vector<8x128xf32>
    %31 = tpu.matmul %29, %30, %cst_8 {dimension_numbers = #tpu.dot_dimension_numbers<[1], [0], [0], [1], [0, 0, 1, 1], [], []>} : vector<8x256xbf16>, vector<256x128xbf16>, vector<8x128xf32> -> vector<8x128xf32>
    %32 = arith.truncf %31 : vector<8x128xf32> to vector<8x128xbf16>
    %c0_9 = arith.constant 0 : index
    %c0_10 = arith.constant 0 : index
    %33 = vector.load %arg3[%c0_9, %c0_10] : memref<16x256xbf16, #tpu.memory_space<vmem>>, vector<16x256xbf16>
    %cst_11 = arith.constant dense<0.000000e+00> : vector<8x256xf32>
    %34 = tpu.matmul %21, %33, %cst_11 {dimension_numbers = #tpu.dot_dimension_numbers<[1], [0], [0], [1], [0, 0, 1, 1], [], []>} : vector<8x16xbf16>, vector<16x256xbf16>, vector<8x256xf32> -> vector<8x256xf32>
    %c0_12 = arith.constant 0 : index
    %c0_13 = arith.constant 0 : index
    %35 = vector.load %arg4[%c0_12, %c0_13] : memref<128x256xbf16, #tpu.memory_space<vmem>>, vector<128x256xbf16>
    %cst_14 = arith.constant dense<0.000000e+00> : vector<8x256xf32>
    %36 = tpu.matmul %32, %35, %cst_14 {dimension_numbers = #tpu.dot_dimension_numbers<[1], [0], [0], [1], [0, 0, 1, 1], [], []>} : vector<8x128xbf16>, vector<128x256xbf16>, vector<8x256xf32> -> vector<8x256xf32>
    %37 = arith.addf %34, %36 : vector<8x256xf32>
    %38 = vector.shape_cast %2 : vector<256xf32> to vector<1x256xf32>
    %39 = vector.broadcast %38 : vector<1x256xf32> to vector<8x256xf32>
    %40 = arith.addf %37, %39 : vector<8x256xf32>
    %cst_15 = arith.constant dense<0.000000e+00> : vector<8xf32>
    %41 = vector.multi_reduction <add>, %40, %cst_15 [1] : vector<8x256xf32> to vector<8xf32>
    %42 = vector.shape_cast %41 : vector<8xf32> to vector<8x1xf32>
    %cst_16 = arith.constant 2.560000e+02 : f32
    %43 = vector.broadcast %cst_16 : f32 to vector<8x1xf32>
    %44 = arith.divf %42, %43 : vector<8x1xf32>
    %45 = arith.mulf %40, %40 : vector<8x256xf32>
    %cst_17 = arith.constant dense<0.000000e+00> : vector<8xf32>
    %46 = vector.multi_reduction <add>, %45, %cst_17 [1] : vector<8x256xf32> to vector<8xf32>
    %47 = vector.shape_cast %46 : vector<8xf32> to vector<8x1xf32>
    %cst_18 = arith.constant 2.560000e+02 : f32
    %48 = vector.broadcast %cst_18 : f32 to vector<8x1xf32>
    %49 = arith.divf %47, %48 : vector<8x1xf32>
    %50 = arith.mulf %44, %44 : vector<8x1xf32>
    %51 = arith.subf %49, %50 : vector<8x1xf32>
    %cst_19 = arith.constant 0.000000e+00 : f32
    %52 = vector.broadcast %cst_19 : f32 to vector<8x1xf32>
    %53 = arith.maximumf %51, %52 : vector<8x1xf32>
    %54 = vector.broadcast %44 : vector<8x1xf32> to vector<8x256xf32>
    %55 = arith.subf %40, %54 : vector<8x256xf32>
    %cst_20 = arith.constant 9.99999974E-6 : f32
    %56 = vector.broadcast %cst_20 : f32 to vector<8x1xf32>
    %57 = arith.addf %53, %56 : vector<8x1xf32>
    %58 = math.rsqrt %57 : vector<8x1xf32>
    %59 = vector.broadcast %58 : vector<8x1xf32> to vector<8x256xf32>
    %60 = arith.mulf %55, %59 : vector<8x256xf32>
    %61 = vector.shape_cast %4 : vector<256xf32> to vector<1x256xf32>
    %62 = vector.broadcast %61 : vector<1x256xf32> to vector<8x256xf32>
    %63 = arith.mulf %60, %62 : vector<8x256xf32>
    %64 = vector.shape_cast %6 : vector<256xf32> to vector<1x256xf32>
    %65 = vector.broadcast %64 : vector<1x256xf32> to vector<8x256xf32>
    %66 = arith.addf %63, %65 : vector<8x256xf32>
    %cst_21 = arith.constant 0.000000e+00 : f32
    %67 = vector.broadcast %cst_21 : f32 to vector<8x256xf32>
    %68 = arith.maximumf %66, %67 : vector<8x256xf32>
    %69 = arith.truncf %68 : vector<8x256xf32> to vector<8x256xbf16>
    %c0_22 = arith.constant 0 : index
    %c0_23 = arith.constant 0 : index
    %70 = vector.load %arg5[%c0_22, %c0_23] : memref<256x256xbf16, #tpu.memory_space<vmem>>, vector<256x256xbf16>
    %cst_24 = arith.constant dense<0.000000e+00> : vector<8x256xf32>
    %71 = tpu.matmul %69, %70, %cst_24 {dimension_numbers = #tpu.dot_dimension_numbers<[1], [0], [0], [1], [0, 0, 1, 1], [], []>} : vector<8x256xbf16>, vector<256x256xbf16>, vector<8x256xf32> -> vector<8x256xf32>
    %72 = vector.shape_cast %8 : vector<256xf32> to vector<1x256xf32>
    %73 = vector.broadcast %72 : vector<1x256xf32> to vector<8x256xf32>
    %74 = arith.addf %71, %73 : vector<8x256xf32>
    %cst_25 = arith.constant dense<0.000000e+00> : vector<8xf32>
    %75 = vector.multi_reduction <add>, %74, %cst_25 [1] : vector<8x256xf32> to vector<8xf32>
    %76 = vector.shape_cast %75 : vector<8xf32> to vector<8x1xf32>
    %cst_26 = arith.constant 2.560000e+02 : f32
    %77 = vector.broadcast %cst_26 : f32 to vector<8x1xf32>
    %78 = arith.divf %76, %77 : vector<8x1xf32>
    %79 = arith.mulf %74, %74 : vector<8x256xf32>
    %cst_27 = arith.constant dense<0.000000e+00> : vector<8xf32>
    %80 = vector.multi_reduction <add>, %79, %cst_27 [1] : vector<8x256xf32> to vector<8xf32>
    %81 = vector.shape_cast %80 : vector<8xf32> to vector<8x1xf32>
    %cst_28 = arith.constant 2.560000e+02 : f32
    %82 = vector.broadcast %cst_28 : f32 to vector<8x1xf32>
    %83 = arith.divf %81, %82 : vector<8x1xf32>
    %84 = arith.mulf %78, %78 : vector<8x1xf32>
    %85 = arith.subf %83, %84 : vector<8x1xf32>
    %cst_29 = arith.constant 0.000000e+00 : f32
    %86 = vector.broadcast %cst_29 : f32 to vector<8x1xf32>
    %87 = arith.maximumf %85, %86 : vector<8x1xf32>
    %88 = vector.broadcast %78 : vector<8x1xf32> to vector<8x256xf32>
    %89 = arith.subf %74, %88 : vector<8x256xf32>
    %cst_30 = arith.constant 9.99999974E-6 : f32
    %90 = vector.broadcast %cst_30 : f32 to vector<8x1xf32>
    %91 = arith.addf %87, %90 : vector<8x1xf32>
    %92 = math.rsqrt %91 : vector<8x1xf32>
    %93 = vector.broadcast %92 : vector<8x1xf32> to vector<8x256xf32>
    %94 = arith.mulf %89, %93 : vector<8x256xf32>
    %95 = vector.shape_cast %10 : vector<256xf32> to vector<1x256xf32>
    %96 = vector.broadcast %95 : vector<1x256xf32> to vector<8x256xf32>
    %97 = arith.mulf %94, %96 : vector<8x256xf32>
    %98 = vector.shape_cast %12 : vector<256xf32> to vector<1x256xf32>
    %99 = vector.broadcast %98 : vector<1x256xf32> to vector<8x256xf32>
    %100 = arith.addf %97, %99 : vector<8x256xf32>
    %cst_31 = arith.constant 0.000000e+00 : f32
    %101 = vector.broadcast %cst_31 : f32 to vector<8x256xf32>
    %102 = arith.maximumf %100, %101 : vector<8x256xf32>
    %103 = arith.truncf %102 : vector<8x256xf32> to vector<8x256xbf16>
    %c0_32 = arith.constant 0 : index
    %c0_33 = arith.constant 0 : index
    %104 = vector.load %arg6[%c0_32, %c0_33] : memref<256x256xbf16, #tpu.memory_space<vmem>>, vector<256x256xbf16>
    %cst_34 = arith.constant dense<0.000000e+00> : vector<8x256xf32>
    %105 = tpu.matmul %103, %104, %cst_34 {dimension_numbers = #tpu.dot_dimension_numbers<[1], [0], [0], [1], [0, 0, 1, 1], [], []>} : vector<8x256xbf16>, vector<256x256xbf16>, vector<8x256xf32> -> vector<8x256xf32>
    %106 = vector.shape_cast %14 : vector<256xf32> to vector<1x256xf32>
    %107 = vector.broadcast %106 : vector<1x256xf32> to vector<8x256xf32>
    %108 = arith.addf %105, %107 : vector<8x256xf32>
    %cst_35 = arith.constant dense<0.000000e+00> : vector<8xf32>
    %109 = vector.multi_reduction <add>, %108, %cst_35 [1] : vector<8x256xf32> to vector<8xf32>
    %110 = vector.shape_cast %109 : vector<8xf32> to vector<8x1xf32>
    %cst_36 = arith.constant 2.560000e+02 : f32
    %111 = vector.broadcast %cst_36 : f32 to vector<8x1xf32>
    %112 = arith.divf %110, %111 : vector<8x1xf32>
    %113 = arith.mulf %108, %108 : vector<8x256xf32>
    %cst_37 = arith.constant dense<0.000000e+00> : vector<8xf32>
    %114 = vector.multi_reduction <add>, %113, %cst_37 [1] : vector<8x256xf32> to vector<8xf32>
    %115 = vector.shape_cast %114 : vector<8xf32> to vector<8x1xf32>
    %cst_38 = arith.constant 2.560000e+02 : f32
    %116 = vector.broadcast %cst_38 : f32 to vector<8x1xf32>
    %117 = arith.divf %115, %116 : vector<8x1xf32>
    %118 = arith.mulf %112, %112 : vector<8x1xf32>
    %119 = arith.subf %117, %118 : vector<8x1xf32>
    %cst_39 = arith.constant 0.000000e+00 : f32
    %120 = vector.broadcast %cst_39 : f32 to vector<8x1xf32>
    %121 = arith.maximumf %119, %120 : vector<8x1xf32>
    %122 = vector.broadcast %112 : vector<8x1xf32> to vector<8x256xf32>
    %123 = arith.subf %108, %122 : vector<8x256xf32>
    %cst_40 = arith.constant 9.99999974E-6 : f32
    %124 = vector.broadcast %cst_40 : f32 to vector<8x1xf32>
    %125 = arith.addf %121, %124 : vector<8x1xf32>
    %126 = math.rsqrt %125 : vector<8x1xf32>
    %127 = vector.broadcast %126 : vector<8x1xf32> to vector<8x256xf32>
    %128 = arith.mulf %123, %127 : vector<8x256xf32>
    %129 = vector.shape_cast %16 : vector<256xf32> to vector<1x256xf32>
    %130 = vector.broadcast %129 : vector<1x256xf32> to vector<8x256xf32>
    %131 = arith.mulf %128, %130 : vector<8x256xf32>
    %132 = vector.shape_cast %18 : vector<256xf32> to vector<1x256xf32>
    %133 = vector.broadcast %132 : vector<1x256xf32> to vector<8x256xf32>
    %134 = arith.addf %131, %133 : vector<8x256xf32>
    %cst_41 = arith.constant 0.000000e+00 : f32
    %135 = vector.broadcast %cst_41 : f32 to vector<8x256xf32>
    %136 = arith.maximumf %134, %135 : vector<8x256xf32>
    %137 = arith.truncf %136 : vector<8x256xf32> to vector<8x256xbf16>
    %c0_42 = arith.constant 0 : index
    %c0_43 = arith.constant 0 : index
    %138 = vector.load %arg7[%c0_42, %c0_43] : memref<256x128xbf16, #tpu.memory_space<vmem>>, vector<256x128xbf16>
    %cst_44 = arith.constant dense<0.000000e+00> : vector<8x128xf32>
    %139 = tpu.matmul %137, %138, %cst_44 {dimension_numbers = #tpu.dot_dimension_numbers<[1], [0], [0], [1], [0, 0, 1, 1], [], []>} : vector<8x256xbf16>, vector<256x128xbf16>, vector<8x128xf32> -> vector<8x128xf32>
    %140 = vector.shape_cast %20 : vector<128xf32> to vector<1x128xf32>
    %141 = vector.broadcast %140 : vector<1x128xf32> to vector<8x128xf32>
    %142 = arith.addf %139, %141 : vector<8x128xf32>
    %c0_45 = arith.constant 0 : index
    %c0_46 = arith.constant 0 : index
    %143 = vector.load %arg10[%c0_45, %c0_46] : memref<8x128xf32, #tpu.memory_space<vmem>>, vector<8x128xf32>
    tpu.vector_store %arg10[%c0_45, %c0_46], %142 {strides = array<i32>} : memref<8x128xf32, #tpu.memory_space<vmem>>, vector<8x128xf32>,
    return
  }
  func.func @transform_0(%arg0: i32) -> (i32, i32) {
    %c0_i32 = arith.constant 0 : i32
    %c0_i32_0 = arith.constant 0 : i32
    return %arg0, %c0_i32 : i32, i32
  }
  func.func @transform_1(%arg0: i32) -> (i32, i32) {
    %c0_i32 = arith.constant 0 : i32
    %c0_i32_0 = arith.constant 0 : i32
    return %arg0, %c0_i32 : i32, i32
  }
  func.func @transform_2(%arg0: i32) -> (i32, i32) {
    %c0_i32 = arith.constant 0 : i32
    %c0_i32_0 = arith.constant 0 : i32
    %c0_i32_1 = arith.constant 0 : i32
    return %c0_i32, %c0_i32_0 : i32, i32
  }
  func.func @transform_3(%arg0: i32) -> (i32, i32) {
    %c0_i32 = arith.constant 0 : i32
    %c0_i32_0 = arith.constant 0 : i32
    %c0_i32_1 = arith.constant 0 : i32
    return %c0_i32, %c0_i32_0 : i32, i32
  }
  func.func @transform_4(%arg0: i32) -> (i32, i32) {
    %c0_i32 = arith.constant 0 : i32
    %c0_i32_0 = arith.constant 0 : i32
    %c0_i32_1 = arith.constant 0 : i32
    return %c0_i32, %c0_i32_0 : i32, i32
  }
  func.func @transform_5(%arg0: i32) -> (i32, i32) {
    %c0_i32 = arith.constant 0 : i32
    %c0_i32_0 = arith.constant 0 : i32
    %c0_i32_1 = arith.constant 0 : i32
    return %c0_i32, %c0_i32_0 : i32, i32
  }
  func.func @transform_6(%arg0: i32) -> (i32, i32) {
    %c0_i32 = arith.constant 0 : i32
    %c0_i32_0 = arith.constant 0 : i32
    %c0_i32_1 = arith.constant 0 : i32
    return %c0_i32, %c0_i32_0 : i32, i32
  }
  func.func @transform_7(%arg0: i32) -> (i32, i32) {
    %c0_i32 = arith.constant 0 : i32
    %c0_i32_0 = arith.constant 0 : i32
    %c0_i32_1 = arith.constant 0 : i32
    return %c0_i32, %c0_i32_0 : i32, i32
  }
  func.func @transform_8(%arg0: i32) -> (i32, i32) {
    %c0_i32 = arith.constant 0 : i32
    %c0_i32_0 = arith.constant 0 : i32
    %c0_i32_1 = arith.constant 0 : i32
    return %c0_i32, %c0_i32_0 : i32, i32
  }
  func.func @transform_9(%arg0: i32) -> (i32, i32) {
    %c0_i32 = arith.constant 0 : i32
    %c0_i32_0 = arith.constant 0 : i32
    return %arg0, %c0_i32 : i32, i32
  }
}

</mosaic_0001>

<llo_original>
// kernel: ddpm_forward.1
$region0: #{ddpm_forward.1}
  #allocation0 [shape = 'u32[]', space=smem, size = 0x4, offset = 0x4, fixed_abs, tag = 'smem constant byte address 0x4 - core index']
  #allocation1 [shape = 'u32[144,128]{1,0:T(1,128)}', space=vmem, size = 0x12000, scoped, tag = 'internal scratch']
  %s0 = inlined_call_operand.vmem [shape: bf16[8,16], index: 0, kind: input, shape index: {}]
  %s1 = inlined_call_operand.vmem [shape: s32[8,1], index: 1, kind: input, shape index: {}]
  %s2 = inlined_call_operand.vmem [shape: bf16[16,256], index: 2, kind: input, shape index: {}]
  %s3 = inlined_call_operand.vmem [shape: bf16[128,256], index: 3, kind: input, shape index: {}]
  %s4 = inlined_call_operand.vmem [shape: bf16[256,256], index: 4, kind: input, shape index: {}]
  %s5 = inlined_call_operand.vmem [shape: bf16[256,256], index: 5, kind: input, shape index: {}]
  %s6 = inlined_call_operand.vmem [shape: bf16[256,128], index: 6, kind: input, shape index: {}]
  %s7 = inlined_call_operand.vmem [shape: bf16[256,128], index: 7, kind: input, shape index: {}]
  %s8 = inlined_call_operand.vmem [shape: f32[16,256], index: 8, kind: input, shape index: {}]
  %s9 = inlined_call_operand.vmem [shape: f32[8,128], index: 9, kind: output, shape index: {}]
  %s10 = sld [smem:[#allocation0]]
  $region46: #{ddpm_forward.1} parent=0
    _
  %s12 = ssub.s32 1, %s10
  %s13 = scalar_select 0, %s12, %s10
  // Predicated region
  $region2: #{ddpm_forward.1} parent=0 // pred_check
    _
  $region3: #{ddpm_forward.1} parent=0 // pred_check_branch
    %15 = sbr.rel (0) target = $region5
  $region4: #{ddpm_forward.1} parent=0 // pred_region
    _
  $region5: #{ddpm_forward.1} parent=0 // pred_fallthru
    _
  // Predicated region
  $region6: #{ddpm_forward.1} parent=0 // pred_check
    _
  $region7: #{ddpm_forward.1} parent=0 // pred_check_branch
    %17 = sbr.rel (0) target = $region9
  $region8: #{ddpm_forward.1} parent=0 // pred_region
    _
  $region9: #{ddpm_forward.1} parent=0 // pred_fallthru
    _
  // Predicated region
  $region10: #{ddpm_forward.1} parent=0 // pred_check
    _
  $region11: #{ddpm_forward.1} parent=0 // pred_check_branch
    %19 = sbr.rel (0) target = $region13
  $region12: #{ddpm_forward.1} parent=0 // pred_region
    _
  $region13: #{ddpm_forward.1} parent=0 // pred_fallthru
    _
  // Predicated region
  $region14: #{ddpm_forward.1} parent=0 // pred_check
    _
  $region15: #{ddpm_forward.1} parent=0 // pred_check_branch
    %21 = sbr.rel (0) target = $region17
  $region16: #{ddpm_forward.1} parent=0 // pred_region
    _
  $region17: #{ddpm_forward.1} parent=0 // pred_fallthru
    _
  // Predicated region
  $region18: #{ddpm_forward.1} parent=0 // pred_check
    _
  $region19: #{ddpm_forward.1} parent=0 // pred_check_branch
    %23 = sbr.rel (0) target = $region21
  $region20: #{ddpm_forward.1} parent=0 // pred_region
    _
  $region21: #{ddpm_forward.1} parent=0 // pred_fallthru
    _
  // Predicated region
  $region22: #{ddpm_forward.1} parent=0 // pred_check
    _
  $region23: #{ddpm_forward.1} parent=0 // pred_check_branch
    %25 = sbr.rel (0) target = $region25
  $region24: #{ddpm_forward.1} parent=0 // pred_region
    _
  $region25: #{ddpm_forward.1} parent=0 // pred_fallthru
    _
  // Predicated region
  $region26: #{ddpm_forward.1} parent=0 // pred_check
    _
  $region27: #{ddpm_forward.1} parent=0 // pred_check_branch
    %27 = sbr.rel (0) target = $region29
  $region28: #{ddpm_forward.1} parent=0 // pred_region
    _
  $region29: #{ddpm_forward.1} parent=0 // pred_fallthru
    _
  // Predicated region
  $region30: #{ddpm_forward.1} parent=0 // pred_check
    _
  $region31: #{ddpm_forward.1} parent=0 // pred_check_branch
    %29 = sbr.rel (0) target = $region33
  $region32: #{ddpm_forward.1} parent=0 // pred_region
    _
  $region33: #{ddpm_forward.1} parent=0 // pred_fallthru
    _
  // Predicated region
  $region34: #{ddpm_forward.1} parent=0 // pred_check
    _
  $region35: #{ddpm_forward.1} parent=0 // pred_check_branch
    %31 = sbr.rel (0) target = $region37
  $region36: #{ddpm_forward.1} parent=0 // pred_region
    _
  $region37: #{ddpm_forward.1} parent=0 // pred_fallthru
    _
  %v33 = vld [vmem:[%s8] sm:$0xff]
  %v34 = vld [vmem:[%s8 + $0x8] sm:$0xff]
  %v35 = vld [vmem:[%s8 + $0x10] sm:$0xff]
  %v36 = vld [vmem:[%s8 + $0x18] sm:$0xff]
  %v37 = vld [vmem:[%s0] sm:$0xf]
  %v38 = vld [vmem:[%s1] sm:$0xff]
  %v39 = vlaneseq
  %v40 = vand.u32 %v39, 127
  %v41 = vadd.s32 %v40, 128
  %42 = vset.pattern.permute.xlu0 0
  %43 = vperm.xlu0 %42, %v38
  %v44 = vpop.permute.xlu0 %43
  %vm45 = vcmp.eq.s32.totalorder %v40, %v44
  %vm46 = vcmp.eq.s32.totalorder %v41, %v44
  %v47 = vsel %vm45, 1.0, 0.0
  %v48 = vsel %vm46, 1.0, 0.0
  %v49 = vpack.c.bf16 %v47, %v47
  %v50 = vpack.c.bf16 %v48, %v48
  %v51 = vld [vmem:[%s7] sm:$0xf]
  %v52 = vld [vmem:[%s7 + $0x4] sm:$0xf]
  %v53 = vld [vmem:[%s7 + $0x8] sm:$0xf]
  %v54 = vld [vmem:[%s7 + $0xc] sm:$0xf]
  %v55 = vld [vmem:[%s7 + $0x10] sm:$0xf]
  %v56 = vld [vmem:[%s7 + $0x14] sm:$0xf]
  %v57 = vld [vmem:[%s7 + $0x18] sm:$0xf]
  %v58 = vld [vmem:[%s7 + $0x1c] sm:$0xf]
  %v59 = vld [vmem:[%s7 + $0x20] sm:$0xf]
  %v60 = vld [vmem:[%s7 + $0x24] sm:$0xf]
  %v61 = vld [vmem:[%s7 + $0x28] sm:$0xf]
  %v62 = vld [vmem:[%s7 + $0x2c] sm:$0xf]
  %v63 = vld [vmem:[%s7 + $0x30] sm:$0xf]
  %v64 = vld [vmem:[%s7 + $0x34] sm:$0xf]
  %v65 = vld [vmem:[%s7 + $0x38] sm:$0xf]
  %v66 = vld [vmem:[%s7 + $0x3c] sm:$0xf]
  %v67 = vld [vmem:[%s7 + $0x40] sm:$0xf]
  %v68 = vld [vmem:[%s7 + $0x44] sm:$0xf]
  %v69 = vld [vmem:[%s7 + $0x48] sm:$0xf]
  %v70 = vld [vmem:[%s7 + $0x4c] sm:$0xf]
  %v71 = vld [vmem:[%s7 + $0x50] sm:$0xf]
  %v72 = vld [vmem:[%s7 + $0x54] sm:$0xf]
  %v73 = vld [vmem:[%s7 + $0x58] sm:$0xf]
  %v74 = vld [vmem:[%s7 + $0x5c] sm:$0xf]
  %v75 = vld [vmem:[%s7 + $0x60] sm:$0xf]
  %v76 = vld [vmem:[%s7 + $0x64] sm:$0xf]
  %v77 = vld [vmem:[%s7 + $0x68] sm:$0xf]
  %v78 = vld [vmem:[%s7 + $0x6c] sm:$0xf]
  %v79 = vld [vmem:[%s7 + $0x70] sm:$0xf]
  %v80 = vld [vmem:[%s7 + $0x74] sm:$0xf]
  %v81 = vld [vmem:[%s7 + $0x78] sm:$0xf]
  %v82 = vld [vmem:[%s7 + $0x7c] sm:$0xf]
  %v115 = vunpack.c.l.b16 %v51
  %v116 = vunpack.c.l.b16 %v52
  %v117 = vunpack.c.l.b16 %v53
  %v118 = vunpack.c.l.b16 %v54
  %v119 = vunpack.c.l.b16 %v55
  %v120 = vunpack.c.l.b16 %v56
  %v121 = vunpack.c.l.b16 %v57
  %v122 = vunpack.c.l.b16 %v58
  %v123 = vunpack.c.l.b16 %v59
  %v124 = vunpack.c.l.b16 %v60
  %v125 = vunpack.c.l.b16 %v61
  %v126 = vunpack.c.l.b16 %v62
  %v127 = vunpack.c.l.b16 %v63
  %v128 = vunpack.c.l.b16 %v64
  %v129 = vunpack.c.l.b16 %v65
  %v130 = vunpack.c.l.b16 %v66
  %v131 = vunpack.c.l.b16 %v67
  %v132 = vunpack.c.l.b16 %v68
  %v133 = vunpack.c.l.b16 %v69
  %v134 = vunpack.c.l.b16 %v70
  %v135 = vunpack.c.l.b16 %v71
  %v136 = vunpack.c.l.b16 %v72
  %v137 = vunpack.c.l.b16 %v73
  %v138 = vunpack.c.l.b16 %v74
  %v139 = vunpack.c.l.b16 %v75
  %v140 = vunpack.c.l.b16 %v76
  %v141 = vunpack.c.l.b16 %v77
  %v142 = vunpack.c.l.b16 %v78
  %v143 = vunpack.c.l.b16 %v79
  %v144 = vunpack.c.l.b16 %v80
  %v145 = vunpack.c.l.b16 %v81
  %v146 = vunpack.c.l.b16 %v82
  %v147 = vpack.c.b16 %v116, %v115
  %v148 = vpack.c.b16 %v118, %v117
  %v149 = vpack.c.b16 %v120, %v119
  %v150 = vpack.c.b16 %v122, %v121
  %v151 = vpack.c.b16 %v124, %v123
  %v152 = vpack.c.b16 %v126, %v125
  %v153 = vpack.c.b16 %v128, %v127
  %v154 = vpack.c.b16 %v130, %v129
  %v155 = vpack.c.b16 %v132, %v131
  %v156 = vpack.c.b16 %v134, %v133
  %v157 = vpack.c.b16 %v136, %v135
  %v158 = vpack.c.b16 %v138, %v137
  %v159 = vpack.c.b16 %v140, %v139
  %v160 = vpack.c.b16 %v142, %v141
  %v161 = vpack.c.b16 %v144, %v143
  %v162 = vpack.c.b16 %v146, %v145
  %179 = vmatprep.subr.bf16.mxu0 0
  %180 = vmatpush1.bf16.msra.mxu0 %v147
  %181 = vmatprep.subr.bf16.mxu0 0
  %182 = vmatpush1.bf16.msra.mxu0 %v148
  %183 = vmatprep.subr.bf16.mxu0 0
  %184 = vmatpush1.bf16.msra.mxu0 %v149
  %185 = vmatprep.subr.bf16.mxu0 0
  %186 = vmatpush1.bf16.msra.mxu0 %v150
  %187 = vmatprep.subr.bf16.mxu0 0
  %188 = vmatpush1.bf16.msra.mxu0 %v151
  %189 = vmatprep.subr.bf16.mxu0 0
  %190 = vmatpush1.bf16.msra.mxu0 %v152
  %191 = vmatprep.subr.bf16.mxu0 0
  %192 = vmatpush1.bf16.msra.mxu0 %v153
  %193 = vmatprep.subr.bf16.mxu0 0
  %194 = vmatpush1.bf16.msra.mxu0 %v154
  %195 = vmatprep.subr.bf16.mxu0 0
  %196 = vmatpush1.bf16.msra.mxu0 %v155
  %197 = vmatprep.subr.bf16.mxu0 0
  %198 = vmatpush1.bf16.msra.mxu0 %v156
  %199 = vmatprep.subr.bf16.mxu0 0
  %200 = vmatpush1.bf16.msra.mxu0 %v157
  %201 = vmatprep.subr.bf16.mxu0 0
  %202 = vmatpush1.bf16.msra.mxu0 %v158
  %203 = vmatprep.subr.bf16.mxu0 0
  %204 = vmatpush1.bf16.msra.mxu0 %v159
  %205 = vmatprep.subr.bf16.mxu0 0
  %206 = vmatpush1.bf16.msra.mxu0 %v160
  %207 = vmatprep.subr.bf16.mxu0 0
  %208 = vmatpush1.bf16.msra.mxu0 %v161
  %209 = vmatprep.subr.bf16.mxu0 0
  %210 = vmatpush1.bf16.msra.mxu0 %v162
  %211 = vmatprep.mubr.bf16.mxu0 %v50
  %212 = vmatmul.mubr.bf16.gmra.mrb[0].mxu0 %v49
  %v213 = vpop.f32.mrb[0].mxu0
  %v214 = vadd.f32 0.0, %v213
  %v215 = vpop.f32.mrb[0].mxu0
  %v216 = vpop.f32.mrb[0].mxu0
  %v217 = vpop.f32.mrb[0].mxu0
  %218 = vdwg.mxu0
  %v219 = vpack.c.bf16 %v214, %v214
  %v220 = vld [vmem:[%s2] sm:$0xff]
  %v221 = vld [vmem:[%s2 + $0x8] sm:$0xff]
  %v222 = vld [vmem:[%s3] sm:$0xff]
  %v223 = vld [vmem:[%s3 + $0x8] sm:$0xff]
  %v224 = vld [vmem:[%s3 + $0x10] sm:$0xff]
  %v225 = vld [vmem:[%s3 + $0x18] sm:$0xff]
  %v226 = vld [vmem:[%s3 + $0x20] sm:$0xff]
  %v227 = vld [vmem:[%s3 + $0x28] sm:$0xff]
  %v228 = vld [vmem:[%s3 + $0x30] sm:$0xff]
  %v229 = vld [vmem:[%s3 + $0x38] sm:$0xff]
  %v230 = vld [vmem:[%s3 + $0x40] sm:$0xff]
  %v231 = vld [vmem:[%s3 + $0x48] sm:$0xff]
  %v232 = vld [vmem:[%s3 + $0x50] sm:$0xff]
  %v233 = vld [vmem:[%s3 + $0x58] sm:$0xff]
  %v234 = vld [vmem:[%s3 + $0x60] sm:$0xff]
  %v235 = vld [vmem:[%s3 + $0x68] sm:$0xff]
  %v236 = vld [vmem:[%s3 + $0x70] sm:$0xff]
  %v237 = vld [vmem:[%s3 + $0x78] sm:$0xff]
  %v254 = vunpack.c.l.b16 %v222
  %v255 = vunpack.c.h.b16 %v222
  %v256 = vunpack.c.l.b16 %v223
  %v257 = vunpack.c.h.b16 %v223
  %v258 = vunpack.c.l.b16 %v224
  %v259 = vunpack.c.h.b16 %v224
  %v260 = vunpack.c.l.b16 %v225
  %v261 = vunpack.c.h.b16 %v225
  %v262 = vunpack.c.l.b16 %v226
  %v263 = vunpack.c.h.b16 %v226
  %v264 = vunpack.c.l.b16 %v227
  %v265 = vunpack.c.h.b16 %v227
  %v266 = vunpack.c.l.b16 %v228
  %v267 = vunpack.c.h.b16 %v228
  %v268 = vunpack.c.l.b16 %v229
  %v269 = vunpack.c.h.b16 %v229
  %v270 = vunpack.c.l.b16 %v230
  %v271 = vunpack.c.h.b16 %v230
  %v272 = vunpack.c.l.b16 %v231
  %v273 = vunpack.c.h.b16 %v231
  %v274 = vunpack.c.l.b16 %v232
  %v275 = vunpack.c.h.b16 %v232
  %v276 = vunpack.c.l.b16 %v233
  %v277 = vunpack.c.h.b16 %v233
  %v278 = vunpack.c.l.b16 %v234
  %v279 = vunpack.c.h.b16 %v234
  %v280 = vunpack.c.l.b16 %v235
  %v281 = vunpack.c.h.b16 %v235
  %v282 = vunpack.c.l.b16 %v236
  %v283 = vunpack.c.h.b16 %v236
  %v284 = vunpack.c.l.b16 %v237
  %v285 = vunpack.c.h.b16 %v237
  %v286 = vpack.c.b16 %v256, %v254
  %v287 = vpack.c.b16 %v257, %v255
  %v288 = vpack.c.b16 %v260, %v258
  %v289 = vpack.c.b16 %v261, %v259
  %v290 = vpack.c.b16 %v264, %v262
  %v291 = vpack.c.b16 %v265, %v263
  %v292 = vpack.c.b16 %v268, %v266
  %v293 = vpack.c.b16 %v269, %v267
  %v294 = vpack.c.b16 %v272, %v270
  %v295 = vpack.c.b16 %v273, %v271
  %v296 = vpack.c.b16 %v276, %v274
  %v297 = vpack.c.b16 %v277, %v275
  %v298 = vpack.c.b16 %v280, %v278
  %v299 = vpack.c.b16 %v281, %v279
  %v300 = vpack.c.b16 %v284, %v282
  %v301 = vpack.c.b16 %v285, %v283
  %318 = vmatprep.subr.bf16.mxu0 %v287
  %319 = vmatpush1.bf16.msra.mxu0 %v286
  %320 = vmatprep.subr.bf16.mxu0 %v289
  %321 = vmatpush1.bf16.msra.mxu0 %v288
  %322 = vmatprep.subr.bf16.mxu0 %v291
  %323 = vmatpush1.bf16.msra.mxu0 %v290
  %324 = vmatprep.subr.bf16.mxu0 %v293
  %325 = vmatpush1.bf16.msra.mxu0 %v292
  %326 = vmatprep.subr.bf16.mxu0 %v295
  %327 = vmatpush1.bf16.msra.mxu0 %v294
  %328 = vmatprep.subr.bf16.mxu0 %v297
  %329 = vmatpush1.bf16.msra.mxu0 %v296
  %330 = vmatprep.subr.bf16.mxu0 %v299
  %331 = vmatpush1.bf16.msra.mxu0 %v298
  %332 = vmatprep.subr.bf16.mxu0 %v301
  %333 = vmatpush1.bf16.msra.mxu0 %v300
  %334 = vmatprep.subr.bf16.mxu0 0
  %335 = vmatpush1.bf16.msra.mxu0 0
  %336 = vmatprep.subr.bf16.mxu0 0
  %337 = vmatpush1.bf16.msra.mxu0 0
  %338 = vmatprep.subr.bf16.mxu0 0
  %339 = vmatpush1.bf16.msra.mxu0 0
  %340 = vmatprep.subr.bf16.mxu0 0
  %341 = vmatpush1.bf16.msra.mxu0 0
  %342 = vmatprep.subr.bf16.mxu0 0
  %343 = vmatpush1.bf16.msra.mxu0 0
  %344 = vmatprep.subr.bf16.mxu0 0
  %345 = vmatpush1.bf16.msra.mxu0 0
  %346 = vmatprep.subr.bf16.mxu0 0
  %347 = vmatpush1.bf16.msra.mxu0 0
  %348 = vmatprep.subr.bf16.mxu0 0
  %349 = vmatpush1.bf16.msra.mxu0 0
  %350 = vmatprep.mubr.bf16.mxu0 0
  %351 = vmatmul.mubr.bf16.gmra.mrb[0].mxu0 %v219
  %v352 = vpop.f32.mrb[0].mxu0
  %v353 = vadd.f32 0.0, %v352
  %v354 = vpop.f32.mrb[0].mxu0
  %v355 = vadd.f32 0.0, %v354
  %v356 = vpop.f32.mrb[0].mxu0
  %v357 = vpop.f32.mrb[0].mxu0
  %358 = vdwg.mxu0
  %v361 = vunpack.c.l.b16 %v220
  %v362 = vunpack.c.h.b16 %v220
  %v363 = vunpack.c.l.b16 %v221
  %v364 = vunpack.c.h.b16 %v221
  %v365 = vpack.c.b16 %v363, %v361
  %v366 = vpack.c.b16 %v364, %v362
  %vm369 = vcmask 130048
  %v371 = vsel %vm369, %v37, 0
  %373 = vmatprep.subr.bf16.mxu0 %v366
  %374 = vmatpush1.bf16.msra.mxu0 %v365
  %375 = vmatprep.subr.bf16.mxu0 0
  %376 = vmatpush1.bf16.msra.mxu0 0
  %377 = vmatprep.subr.bf16.mxu0 0
  %378 = vmatpush1.bf16.msra.mxu0 0
  %379 = vmatprep.subr.bf16.mxu0 0
  %380 = vmatpush1.bf16.msra.mxu0 0
  %381 = vmatprep.subr.bf16.mxu0 0
  %382 = vmatpush1.bf16.msra.mxu0 0
  %383 = vmatprep.subr.bf16.mxu0 0
  %384 = vmatpush1.bf16.msra.mxu0 0
  %385 = vmatprep.subr.bf16.mxu0 0
  %386 = vmatpush1.bf16.msra.mxu0 0
  %387 = vmatprep.subr.bf16.mxu0 0
  %388 = vmatpush1.bf16.msra.mxu0 0
  %389 = vmatprep.subr.bf16.mxu0 0
  %390 = vmatpush1.bf16.msra.mxu0 0
  %391 = vmatprep.subr.bf16.mxu0 0
  %392 = vmatpush1.bf16.msra.mxu0 0
  %393 = vmatprep.subr.bf16.mxu0 0
  %394 = vmatpush1.bf16.msra.mxu0 0
  %395 = vmatprep.subr.bf16.mxu0 0
  %396 = vmatpush1.bf16.msra.mxu0 0
  %397 = vmatprep.subr.bf16.mxu0 0
  %398 = vmatpush1.bf16.msra.mxu0 0
  %399 = vmatprep.subr.bf16.mxu0 0
  %400 = vmatpush1.bf16.msra.mxu0 0
  %401 = vmatprep.subr.bf16.mxu0 0
  %402 = vmatpush1.bf16.msra.mxu0 0
  %403 = vmatprep.subr.bf16.mxu0 0
  %404 = vmatpush1.bf16.msra.mxu0 0
  %405 = vmatprep.mubr.bf16.mxu0 0
  %406 = vmatmul.mubr.bf16.gmra.mrb[0].mxu0 %v371
  %v407 = vpop.f32.mrb[0].mxu0
  %v408 = vadd.f32 %v353, %v407
  %v409 = vpop.f32.mrb[0].mxu0
  %v410 = vadd.f32 %v355, %v409
  %v411 = vpop.f32.mrb[0].mxu0
  %v412 = vpop.f32.mrb[0].mxu0
  %413 = vdwg.mxu0
  %v414 = vlaneseq
  %v415 = vshrl.u32 %v414, 7
  %v416 = vsub.s32 0, %v415
  %v417 = vrot.slane %v33, %v416
  %v418 = vlaneseq
  %v419 = vshrl.u32 %v418, 7
  %v420 = vsub.s32 0, %v419
  %v421 = vrot.slane %v34, %v420
  %v422 = vadd.f32 %v408, %v417
  %v423 = vadd.f32 %v410, %v421
  %v424 = vadd.f32 %v422, %v423
  %425 = vadd.xlane.f32.xlu0 %v424
  %v426 = vpop.xlane.xlu0 %425
  %v427 = vrcp.pop 256.0
  %v428 = vmul.f32 %v426, %v427
  %v429 = vmul.f32 %v422, %v422
  %v430 = vmul.f32 %v423, %v423
  %v431 = vadd.f32 %v429, %v430
  %432 = vadd.xlane.f32.xlu0 %v431
  %v433 = vpop.xlane.xlu0 %432
  %v434 = vmul.f32 %v433, %v427
  %v435 = vmul.f32 %v428, %v428
  %v436 = vsub.f32 %v434, %v435
  %v437 = vmax.f32 %v436, 0.0
  %v438 = vsub.f32 %v422, %v428
  %v439 = vsub.f32 %v423, %v428
  %v440 = vadd.f32 %v437, 1e-05
  %v441 = vrsqrt.pop %v440
  %v442 = vmul.f32 %v438, %v441
  %v443 = vmul.f32 %v439, %v441
  %v444 = vlaneseq
  %v445 = vshrl.u32 %v444, 7
  %v446 = vsub.s32 1, %v445
  %v447 = vrot.slane %v33, %v446
  %v448 = vlaneseq
  %v449 = vshrl.u32 %v448, 7
  %v450 = vsub.s32 1, %v449
  %v451 = vrot.slane %v34, %v450
  %v452 = vmul.f32 %v442, %v447
  %v453 = vmul.f32 %v443, %v451
  %v454 = vlaneseq
  %v455 = vshrl.u32 %v454, 7
  %v456 = vsub.s32 2, %v455
  %v457 = vrot.slane %v33, %v456
  %v458 = vlaneseq
  %v459 = vshrl.u32 %v458, 7
  %v460 = vsub.s32 2, %v459
  %v461 = vrot.slane %v34, %v460
  %v462 = vadd.f32 %v452, %v457
  %v463 = vadd.f32 %v453, %v461
  %v464 = vmax.f32 %v462, 0.0
  %v465 = vmax.f32 %v463, 0.0
  %v466 = vpack.c.bf16 %v464, %v464
  %v467 = vpack.c.bf16 %v465, %v465
  %v468 = vld [vmem:[%s4] sm:$0xff]
  %v469 = vld [vmem:[%s4 + $0x8] sm:$0xff]
  %v470 = vld [vmem:[%s4 + $0x10] sm:$0xff]
  %v471 = vld [vmem:[%s4 + $0x18] sm:$0xff]
  %v472 = vld [vmem:[%s4 + $0x20] sm:$0xff]
  %v473 = vld [vmem:[%s4 + $0x28] sm:$0xff]
  %v474 = vld [vmem:[%s4 + $0x30] sm:$0xff]
  %v475 = vld [vmem:[%s4 + $0x38] sm:$0xff]
  %v476 = vld [vmem:[%s4 + $0x40] sm:$0xff]
  %v477 = vld [vmem:[%s4 + $0x48] sm:$0xff]
  %v478 = vld [vmem:[%s4 + $0x50] sm:$0xff]
  %v479 = vld [vmem:[%s4 + $0x58] sm:$0xff]
  %v480 = vld [vmem:[%s4 + $0x60] sm:$0xff]
  %v481 = vld [vmem:[%s4 + $0x68] sm:$0xff]
  %v482 = vld [vmem:[%s4 + $0x70] sm:$0xff]
  %v483 = vld [vmem:[%s4 + $0x78] sm:$0xff]
  %v484 = vld [vmem:[%s4 + $0x80] sm:$0xff]
  %v485 = vld [vmem:[%s4 + $0x88] sm:$0xff]
  %v486 = vld [vmem:[%s4 + $0x90] sm:$0xff]
  %v487 = vld [vmem:[%s4 + $0x98] sm:$0xff]
  %v488 = vld [vmem:[%s4 + $0xa0] sm:$0xff]
  %v489 = vld [vmem:[%s4 + $0xa8] sm:$0xff]
  %v490 = vld [vmem:[%s4 + $0xb0] sm:$0xff]
  %v491 = vld [vmem:[%s4 + $0xb8] sm:$0xff]
  %v492 = vld [vmem:[%s4 + $0xc0] sm:$0xff]
  %v493 = vld [vmem:[%s4 + $0xc8] sm:$0xff]
  %v494 = vld [vmem:[%s4 + $0xd0] sm:$0xff]
  %v495 = vld [vmem:[%s4 + $0xd8] sm:$0xff]
  %v496 = vld [vmem:[%s4 + $0xe0] sm:$0xff]
  %v497 = vld [vmem:[%s4 + $0xe8] sm:$0xff]
  %v498 = vld [vmem:[%s4 + $0xf0] sm:$0xff]
  %v499 = vld [vmem:[%s4 + $0xf8] sm:$0xff]
  %v500 = vlaneseq
  %v501 = vshrl.u32 %v500, 7
  %v502 = vsub.s32 3, %v501
  %v503 = vrot.slane %v33, %v502
  %v504 = vlaneseq
  %v505 = vshrl.u32 %v504, 7
  %v506 = vsub.s32 3, %v505
  %v507 = vrot.slane %v34, %v506
  %v540 = vunpack.c.l.b16 %v468
  %v541 = vunpack.c.h.b16 %v468
  %v542 = vunpack.c.l.b16 %v469
  %v543 = vunpack.c.h.b16 %v469
  %v544 = vunpack.c.l.b16 %v470
  %v545 = vunpack.c.h.b16 %v470
  %v546 = vunpack.c.l.b16 %v471
  %v547 = vunpack.c.h.b16 %v471
  %v548 = vunpack.c.l.b16 %v472
  %v549 = vunpack.c.h.b16 %v472
  %v550 = vunpack.c.l.b16 %v473
  %v551 = vunpack.c.h.b16 %v473
  %v552 = vunpack.c.l.b16 %v474
  %v553 = vunpack.c.h.b16 %v474
  %v554 = vunpack.c.l.b16 %v475
  %v555 = vunpack.c.h.b16 %v475
  %v556 = vunpack.c.l.b16 %v476
  %v557 = vunpack.c.h.b16 %v476
  %v558 = vunpack.c.l.b16 %v477
  %v559 = vunpack.c.h.b16 %v477
  %v560 = vunpack.c.l.b16 %v478
  %v561 = vunpack.c.h.b16 %v478
  %v562 = vunpack.c.l.b16 %v479
  %v563 = vunpack.c.h.b16 %v479
  %v564 = vunpack.c.l.b16 %v480
  %v565 = vunpack.c.h.b16 %v480
  %v566 = vunpack.c.l.b16 %v481
  %v567 = vunpack.c.h.b16 %v481
  %v568 = vunpack.c.l.b16 %v482
  %v569 = vunpack.c.h.b16 %v482
  %v570 = vunpack.c.l.b16 %v483
  %v571 = vunpack.c.h.b16 %v483
  %v572 = vunpack.c.l.b16 %v484
  %v573 = vunpack.c.h.b16 %v484
  %v574 = vunpack.c.l.b16 %v485
  %v575 = vunpack.c.h.b16 %v485
  %v576 = vunpack.c.l.b16 %v486
  %v577 = vunpack.c.h.b16 %v486
  %v578 = vunpack.c.l.b16 %v487
  %v579 = vunpack.c.h.b16 %v487
  %v580 = vunpack.c.l.b16 %v488
  %v581 = vunpack.c.h.b16 %v488
  %v582 = vunpack.c.l.b16 %v489
  %v583 = vunpack.c.h.b16 %v489
  %v584 = vunpack.c.l.b16 %v490
  %v585 = vunpack.c.h.b16 %v490
  %v586 = vunpack.c.l.b16 %v491
  %v587 = vunpack.c.h.b16 %v491
  %v588 = vunpack.c.l.b16 %v492
  %v589 = vunpack.c.h.b16 %v492
  %v590 = vunpack.c.l.b16 %v493
  %v591 = vunpack.c.h.b16 %v493
  %v592 = vunpack.c.l.b16 %v494
  %v593 = vunpack.c.h.b16 %v494
  %v594 = vunpack.c.l.b16 %v495
  %v595 = vunpack.c.h.b16 %v495
  %v596 = vunpack.c.l.b16 %v496
  %v597 = vunpack.c.h.b16 %v496
  %v598 = vunpack.c.l.b16 %v497
  %v599 = vunpack.c.h.b16 %v497
  %v600 = vunpack.c.l.b16 %v498
  %v601 = vunpack.c.h.b16 %v498
  %v602 = vunpack.c.l.b16 %v499
  %v603 = vunpack.c.h.b16 %v499
  %v604 = vpack.c.b16 %v542, %v540
  %v605 = vpack.c.b16 %v543, %v541
  %v606 = vpack.c.b16 %v546, %v544
  %v607 = vpack.c.b16 %v547, %v545
  %v608 = vpack.c.b16 %v550, %v548
  %v609 = vpack.c.b16 %v551, %v549
  %v610 = vpack.c.b16 %v554, %v552
  %v611 = vpack.c.b16 %v555, %v553
  %v612 = vpack.c.b16 %v558, %v556
  %v613 = vpack.c.b16 %v559, %v557
  %v614 = vpack.c.b16 %v562, %v560
  %v615 = vpack.c.b16 %v563, %v561
  %v616 = vpack.c.b16 %v566, %v564
  %v617 = vpack.c.b16 %v567, %v565
  %v618 = vpack.c.b16 %v570, %v568
  %v619 = vpack.c.b16 %v571, %v569
  %v620 = vpack.c.b16 %v574, %v572
  %v621 = vpack.c.b16 %v575, %v573
  %v622 = vpack.c.b16 %v578, %v576
  %v623 = vpack.c.b16 %v579, %v577
  %v624 = vpack.c.b16 %v582, %v580
  %v625 = vpack.c.b16 %v583, %v581
  %v626 = vpack.c.b16 %v586, %v584
  %v627 = vpack.c.b16 %v587, %v585
  %v628 = vpack.c.b16 %v590, %v588
  %v629 = vpack.c.b16 %v591, %v589
  %v630 = vpack.c.b16 %v594, %v592
  %v631 = vpack.c.b16 %v595, %v593
  %v632 = vpack.c.b16 %v598, %v596
  %v633 = vpack.c.b16 %v599, %v597
  %v634 = vpack.c.b16 %v602, %v600
  %v635 = vpack.c.b16 %v603, %v601
  %668 = vmatprep.subr.bf16.mxu0 %v605
  %669 = vmatpush1.bf16.msra.mxu0 %v604
  %670 = vmatprep.subr.bf16.mxu0 %v607
  %671 = vmatpush1.bf16.msra.mxu0 %v606
  %672 = vmatprep.subr.bf16.mxu0 %v609
  %673 = vmatpush1.bf16.msra.mxu0 %v608
  %674 = vmatprep.subr.bf16.mxu0 %v611
  %675 = vmatpush1.bf16.msra.mxu0 %v610
  %676 = vmatprep.subr.bf16.mxu0 %v613
  %677 = vmatpush1.bf16.msra.mxu0 %v612
  %678 = vmatprep.subr.bf16.mxu0 %v615
  %679 = vmatpush1.bf16.msra.mxu0 %v614
  %680 = vmatprep.subr.bf16.mxu0 %v617
  %681 = vmatpush1.bf16.msra.mxu0 %v616
  %682 = vmatprep.subr.bf16.mxu0 %v619
  %683 = vmatpush1.bf16.msra.mxu0 %v618
  %684 = vmatprep.subr.bf16.mxu0 %v621
  %685 = vmatpush1.bf16.msra.mxu0 %v620
  %686 = vmatprep.subr.bf16.mxu0 %v623
  %687 = vmatpush1.bf16.msra.mxu0 %v622
  %688 = vmatprep.subr.bf16.mxu0 %v625
  %689 = vmatpush1.bf16.msra.mxu0 %v624
  %690 = vmatprep.subr.bf16.mxu0 %v627
  %691 = vmatpush1.bf16.msra.mxu0 %v626
  %692 = vmatprep.subr.bf16.mxu0 %v629
  %693 = vmatpush1.bf16.msra.mxu0 %v628
  %694 = vmatprep.subr.bf16.mxu0 %v631
  %695 = vmatpush1.bf16.msra.mxu0 %v630
  %696 = vmatprep.subr.bf16.mxu0 %v633
  %697 = vmatpush1.bf16.msra.mxu0 %v632
  %698 = vmatprep.subr.bf16.mxu0 %v635
  %699 = vmatpush1.bf16.msra.mxu0 %v634
  %700 = vmatprep.mubr.bf16.mxu0 %v467
  %701 = vmatmul.mubr.bf16.gmra.mrb[0].mxu0 %v466
  %v702 = vpop.f32.mrb[0].mxu0
  %v703 = vadd.f32 %v503, %v702
  %v704 = vpop.f32.mrb[0].mxu0
  %v705 = vadd.f32 %v507, %v704
  %v706 = vpop.f32.mrb[0].mxu0
  %v707 = vpop.f32.mrb[0].mxu0
  %708 = vdwg.mxu0
  %v709 = vadd.f32 %v703, %v705
  %710 = vadd.xlane.f32.xlu0 %v709
  %v711 = vpop.xlane.xlu0 %710
  %v712 = vmul.f32 %v711, %v427
  %v713 = vmul.f32 %v703, %v703
  %v714 = vmul.f32 %v705, %v705
  %v715 = vadd.f32 %v713, %v714
  %716 = vadd.xlane.f32.xlu0 %v715
  %v717 = vpop.xlane.xlu0 %716
  %v718 = vmul.f32 %v717, %v427
  %v719 = vmul.f32 %v712, %v712
  %v720 = vsub.f32 %v718, %v719
  %v721 = vmax.f32 %v720, 0.0
  %v722 = vsub.f32 %v703, %v712
  %v723 = vsub.f32 %v705, %v712
  %v724 = vadd.f32 %v721, 1e-05
  %v725 = vrsqrt.pop %v724
  %v726 = vmul.f32 %v722, %v725
  %v727 = vmul.f32 %v723, %v725
  %v728 = vlaneseq
  %v729 = vshrl.u32 %v728, 7
  %v730 = vsub.s32 4, %v729
  %v731 = vrot.slane %v33, %v730
  %v732 = vlaneseq
  %v733 = vshrl.u32 %v732, 7
  %v734 = vsub.s32 4, %v733
  %v735 = vrot.slane %v34, %v734
  %v736 = vmul.f32 %v726, %v731
  %v737 = vmul.f32 %v727, %v735
  %v738 = vlaneseq
  %v739 = vshrl.u32 %v738, 7
  %v740 = vsub.s32 5, %v739
  %v741 = vrot.slane %v33, %v740
  %v742 = vlaneseq
  %v743 = vshrl.u32 %v742, 7
  %v744 = vsub.s32 5, %v743
  %v745 = vrot.slane %v34, %v744
  %v746 = vadd.f32 %v736, %v741
  %v747 = vadd.f32 %v737, %v745
  %v748 = vmax.f32 %v746, 0.0
  %v749 = vmax.f32 %v747, 0.0
  %v750 = vpack.c.bf16 %v748, %v748
  %v751 = vpack.c.bf16 %v749, %v749
  %v752 = vld [vmem:[%s5] sm:$0xff]
  %v753 = vld [vmem:[%s5 + $0x8] sm:$0xff]
  %v754 = vld [vmem:[%s5 + $0x10] sm:$0xff]
  %v755 = vld [vmem:[%s5 + $0x18] sm:$0xff]
  %v756 = vld [vmem:[%s5 + $0x20] sm:$0xff]
  %v757 = vld [vmem:[%s5 + $0x28] sm:$0xff]
  %v758 = vld [vmem:[%s5 + $0x30] sm:$0xff]
  %v759 = vld [vmem:[%s5 + $0x38] sm:$0xff]
  %v760 = vld [vmem:[%s5 + $0x40] sm:$0xff]
  %v761 = vld [vmem:[%s5 + $0x48] sm:$0xff]
  %v762 = vld [vmem:[%s5 + $0x50] sm:$0xff]
  %v763 = vld [vmem:[%s5 + $0x58] sm:$0xff]
  %v764 = vld [vmem:[%s5 + $0x60] sm:$0xff]
  %v765 = vld [vmem:[%s5 + $0x68] sm:$0xff]
  %v766 = vld [vmem:[%s5 + $0x70] sm:$0xff]
  %v767 = vld [vmem:[%s5 + $0x78] sm:$0xff]
  %v768 = vld [vmem:[%s5 + $0x80] sm:$0xff]
  %v769 = vld [vmem:[%s5 + $0x88] sm:$0xff]
  %v770 = vld [vmem:[%s5 + $0x90] sm:$0xff]
  %v771 = vld [vmem:[%s5 + $0x98] sm:$0xff]
  %v772 = vld [vmem:[%s5 + $0xa0] sm:$0xff]
  %v773 = vld [vmem:[%s5 + $0xa8] sm:$0xff]
  %v774 = vld [vmem:[%s5 + $0xb0] sm:$0xff]
  %v775 = vld [vmem:[%s5 + $0xb8] sm:$0xff]
  %v776 = vld [vmem:[%s5 + $0xc0] sm:$0xff]
  %v777 = vld [vmem:[%s5 + $0xc8] sm:$0xff]
  %v778 = vld [vmem:[%s5 + $0xd0] sm:$0xff]
  %v779 = vld [vmem:[%s5 + $0xd8] sm:$0xff]
  %v780 = vld [vmem:[%s5 + $0xe0] sm:$0xff]
  %v781 = vld [vmem:[%s5 + $0xe8] sm:$0xff]
  %v782 = vld [vmem:[%s5 + $0xf0] sm:$0xff]
  %v783 = vld [vmem:[%s5 + $0xf8] sm:$0xff]
  %v784 = vlaneseq
  %v785 = vshrl.u32 %v784, 7
  %v786 = vsub.s32 6, %v785
  %v787 = vrot.slane %v33, %v786
  %v788 = vlaneseq
  %v789 = vshrl.u32 %v788, 7
  %v790 = vsub.s32 6, %v789
  %v791 = vrot.slane %v34, %v790
  %v824 = vunpack.c.l.b16 %v752
  %v825 = vunpack.c.h.b16 %v752
  %v826 = vunpack.c.l.b16 %v753
  %v827 = vunpack.c.h.b16 %v753
  %v828 = vunpack.c.l.b16 %v754
  %v829 = vunpack.c.h.b16 %v754
  %v830 = vunpack.c.l.b16 %v755
  %v831 = vunpack.c.h.b16 %v755
  %v832 = vunpack.c.l.b16 %v756
  %v833 = vunpack.c.h.b16 %v756
  %v834 = vunpack.c.l.b16 %v757
  %v835 = vunpack.c.h.b16 %v757
  %v836 = vunpack.c.l.b16 %v758
  %v837 = vunpack.c.h.b16 %v758
  %v838 = vunpack.c.l.b16 %v759
  %v839 = vunpack.c.h.b16 %v759
  %v840 = vunpack.c.l.b16 %v760
  %v841 = vunpack.c.h.b16 %v760
  %v842 = vunpack.c.l.b16 %v761
  %v843 = vunpack.c.h.b16 %v761
  %v844 = vunpack.c.l.b16 %v762
  %v845 = vunpack.c.h.b16 %v762
  %v846 = vunpack.c.l.b16 %v763
  %v847 = vunpack.c.h.b16 %v763
  %v848 = vunpack.c.l.b16 %v764
  %v849 = vunpack.c.h.b16 %v764
  %v850 = vunpack.c.l.b16 %v765
  %v851 = vunpack.c.h.b16 %v765
  %v852 = vunpack.c.l.b16 %v766
  %v853 = vunpack.c.h.b16 %v766
  %v854 = vunpack.c.l.b16 %v767
  %v855 = vunpack.c.h.b16 %v767
  %v856 = vunpack.c.l.b16 %v768
  %v857 = vunpack.c.h.b16 %v768
  %v858 = vunpack.c.l.b16 %v769
  %v859 = vunpack.c.h.b16 %v769
  %v860 = vunpack.c.l.b16 %v770
  %v861 = vunpack.c.h.b16 %v770
  %v862 = vunpack.c.l.b16 %v771
  %v863 = vunpack.c.h.b16 %v771
  %v864 = vunpack.c.l.b16 %v772
  %v865 = vunpack.c.h.b16 %v772
  %v866 = vunpack.c.l.b16 %v773
  %v867 = vunpack.c.h.b16 %v773
  %v868 = vunpack.c.l.b16 %v774
  %v869 = vunpack.c.h.b16 %v774
  %v870 = vunpack.c.l.b16 %v775
  %v871 = vunpack.c.h.b16 %v775
  %v872 = vunpack.c.l.b16 %v776
  %v873 = vunpack.c.h.b16 %v776
  %v874 = vunpack.c.l.b16 %v777
  %v875 = vunpack.c.h.b16 %v777
  %v876 = vunpack.c.l.b16 %v778
  %v877 = vunpack.c.h.b16 %v778
  %v878 = vunpack.c.l.b16 %v779
  %v879 = vunpack.c.h.b16 %v779
  %v880 = vunpack.c.l.b16 %v780
  %v881 = vunpack.c.h.b16 %v780
  %v882 = vunpack.c.l.b16 %v781
  %v883 = vunpack.c.h.b16 %v781
  %v884 = vunpack.c.l.b16 %v782
  %v885 = vunpack.c.h.b16 %v782
  %v886 = vunpack.c.l.b16 %v783
  %v887 = vunpack.c.h.b16 %v783
  %v888 = vpack.c.b16 %v826, %v824
  %v889 = vpack.c.b16 %v827, %v825
  %v890 = vpack.c.b16 %v830, %v828
  %v891 = vpack.c.b16 %v831, %v829
  %v892 = vpack.c.b16 %v834, %v832
  %v893 = vpack.c.b16 %v835, %v833
  %v894 = vpack.c.b16 %v838, %v836
  %v895 = vpack.c.b16 %v839, %v837
  %v896 = vpack.c.b16 %v842, %v840
  %v897 = vpack.c.b16 %v843, %v841
  %v898 = vpack.c.b16 %v846, %v844
  %v899 = vpack.c.b16 %v847, %v845
  %v900 = vpack.c.b16 %v850, %v848
  %v901 = vpack.c.b16 %v851, %v849
  %v902 = vpack.c.b16 %v854, %v852
  %v903 = vpack.c.b16 %v855, %v853
  %v904 = vpack.c.b16 %v858, %v856
  %v905 = vpack.c.b16 %v859, %v857
  %v906 = vpack.c.b16 %v862, %v860
  %v907 = vpack.c.b16 %v863, %v861
  %v908 = vpack.c.b16 %v866, %v864
  %v909 = vpack.c.b16 %v867, %v865
  %v910 = vpack.c.b16 %v870, %v868
  %v911 = vpack.c.b16 %v871, %v869
  %v912 = vpack.c.b16 %v874, %v872
  %v913 = vpack.c.b16 %v875, %v873
  %v914 = vpack.c.b16 %v878, %v876
  %v915 = vpack.c.b16 %v879, %v877
  %v916 = vpack.c.b16 %v882, %v880
  %v917 = vpack.c.b16 %v883, %v881
  %v918 = vpack.c.b16 %v886, %v884
  %v919 = vpack.c.b16 %v887, %v885
  %952 = vmatprep.subr.bf16.mxu0 %v889
  %953 = vmatpush1.bf16.msra.mxu0 %v888
  %954 = vmatprep.subr.bf16.mxu0 %v891
  %955 = vmatpush1.bf16.msra.mxu0 %v890
  %956 = vmatprep.subr.bf16.mxu0 %v893
  %957 = vmatpush1.bf16.msra.mxu0 %v892
  %958 = vmatprep.subr.bf16.mxu0 %v895
  %959 = vmatpush1.bf16.msra.mxu0 %v894
  %960 = vmatprep.subr.bf16.mxu0 %v897
  %961 = vmatpush1.bf16.msra.mxu0 %v896
  %962 = vmatprep.subr.bf16.mxu0 %v899
  %963 = vmatpush1.bf16.msra.mxu0 %v898
  %964 = vmatprep.subr.bf16.mxu0 %v901
  %965 = vmatpush1.bf16.msra.mxu0 %v900
  %966 = vmatprep.subr.bf16.mxu0 %v903
  %967 = vmatpush1.bf16.msra.mxu0 %v902
  %968 = vmatprep.subr.bf16.mxu0 %v905
  %969 = vmatpush1.bf16.msra.mxu0 %v904
  %970 = vmatprep.subr.bf16.mxu0 %v907
  %971 = vmatpush1.bf16.msra.mxu0 %v906
  %972 = vmatprep.subr.bf16.mxu0 %v909
  %973 = vmatpush1.bf16.msra.mxu0 %v908
  %974 = vmatprep.subr.bf16.mxu0 %v911
  %975 = vmatpush1.bf16.msra.mxu0 %v910
  %976 = vmatprep.subr.bf16.mxu0 %v913
  %977 = vmatpush1.bf16.msra.mxu0 %v912
  %978 = vmatprep.subr.bf16.mxu0 %v915
  %979 = vmatpush1.bf16.msra.mxu0 %v914
  %980 = vmatprep.subr.bf16.mxu0 %v917
  %981 = vmatpush1.bf16.msra.mxu0 %v916
  %982 = vmatprep.subr.bf16.mxu0 %v919
  %983 = vmatpush1.bf16.msra.mxu0 %v918
  %984 = vmatprep.mubr.bf16.mxu0 %v751
  %985 = vmatmul.mubr.bf16.gmra.mrb[0].mxu0 %v750
  %v986 = vpop.f32.mrb[0].mxu0
  %v987 = vadd.f32 %v787, %v986
  %v988 = vpop.f32.mrb[0].mxu0
  %v989 = vadd.f32 %v791, %v988
  %v990 = vpop.f32.mrb[0].mxu0
  %v991 = vpop.f32.mrb[0].mxu0
  %992 = vdwg.mxu0
  %v993 = vadd.f32 %v987, %v989
  %994 = vadd.xlane.f32.xlu0 %v993
  %v995 = vpop.xlane.xlu0 %994
  %v996 = vmul.f32 %v995, %v427
  %v997 = vmul.f32 %v987, %v987
  %v998 = vmul.f32 %v989, %v989
  %v999 = vadd.f32 %v997, %v998
  %1000 = vadd.xlane.f32.xlu0 %v999
  %v1001 = vpop.xlane.xlu0 %1000
  %v1002 = vmul.f32 %v1001, %v427
  %v1003 = vmul.f32 %v996, %v996
  %v1004 = vsub.f32 %v1002, %v1003
  %v1005 = vmax.f32 %v1004, 0.0
  %v1006 = vsub.f32 %v987, %v996
  %v1007 = vsub.f32 %v989, %v996
  %v1008 = vadd.f32 %v1005, 1e-05
  %v1009 = vrsqrt.pop %v1008
  %v1010 = vmul.f32 %v1006, %v1009
  %v1011 = vmul.f32 %v1007, %v1009
  %v1012 = vlaneseq
  %v1013 = vshrl.u32 %v1012, 7
  %v1014 = vsub.s32 7, %v1013
  %v1015 = vrot.slane %v33, %v1014
  %v1016 = vlaneseq
  %v1017 = vshrl.u32 %v1016, 7
  %v1018 = vsub.s32 7, %v1017
  %v1019 = vrot.slane %v34, %v1018
  %v1020 = vmul.f32 %v1010, %v1015
  %v1021 = vmul.f32 %v1011, %v1019
  %v1022 = vlaneseq
  %v1023 = vshrl.u32 %v1022, 7
  %v1024 = vsub.s32 0, %v1023
  %v1025 = vrot.slane %v35, %v1024
  %v1026 = vlaneseq
  %v1027 = vshrl.u32 %v1026, 7
  %v1028 = vsub.s32 0, %v1027
  %v1029 = vrot.slane %v36, %v1028
  %v1030 = vadd.f32 %v1020, %v1025
  %v1031 = vadd.f32 %v1021, %v1029
  %v1032 = vmax.f32 %v1030, 0.0
  %v1033 = vmax.f32 %v1031, 0.0
  %v1034 = vpack.c.bf16 %v1032, %v1032
  %v1035 = vpack.c.bf16 %v1033, %v1033
  %v1036 = vld [vmem:[%s6] sm:$0xf]
  %v1037 = vld [vmem:[%s6 + $0x4] sm:$0xf]
  %v1038 = vld [vmem:[%s6 + $0x8] sm:$0xf]
  %v1039 = vld [vmem:[%s6 + $0xc] sm:$0xf]
  %v1040 = vld [vmem:[%s6 + $0x10] sm:$0xf]
  %v1041 = vld [vmem:[%s6 + $0x14] sm:$0xf]
  %v1042 = vld [vmem:[%s6 + $0x18] sm:$0xf]
  %v1043 = vld [vmem:[%s6 + $0x1c] sm:$0xf]
  %v1044 = vld [vmem:[%s6 + $0x20] sm:$0xf]
  %v1045 = vld [vmem:[%s6 + $0x24] sm:$0xf]
  %v1046 = vld [vmem:[%s6 + $0x28] sm:$0xf]
  %v1047 = vld [vmem:[%s6 + $0x2c] sm:$0xf]
  %v1048 = vld [vmem:[%s6 + $0x30] sm:$0xf]
  %v1049 = vld [vmem:[%s6 + $0x34] sm:$0xf]
  %v1050 = vld [vmem:[%s6 + $0x38] sm:$0xf]
  %v1051 = vld [vmem:[%s6 + $0x3c] sm:$0xf]
  %v1052 = vld [vmem:[%s6 + $0x40] sm:$0xf]
  %v1053 = vld [vmem:[%s6 + $0x44] sm:$0xf]
  %v1054 = vld [vmem:[%s6 + $0x48] sm:$0xf]
  %v1055 = vld [vmem:[%s6 + $0x4c] sm:$0xf]
  %v1056 = vld [vmem:[%s6 + $0x50] sm:$0xf]
  %v1057 = vld [vmem:[%s6 + $0x54] sm:$0xf]
  %v1058 = vld [vmem:[%s6 + $0x58] sm:$0xf]
  %v1059 = vld [vmem:[%s6 + $0x5c] sm:$0xf]
  %v1060 = vld [vmem:[%s6 + $0x60] sm:$0xf]
  %v1061 = vld [vmem:[%s6 + $0x64] sm:$0xf]
  %v1062 = vld [vmem:[%s6 + $0x68] sm:$0xf]
  %v1063 = vld [vmem:[%s6 + $0x6c] sm:$0xf]
  %v1064 = vld [vmem:[%s6 + $0x70] sm:$0xf]
  %v1065 = vld [vmem:[%s6 + $0x74] sm:$0xf]
  %v1066 = vld [vmem:[%s6 + $0x78] sm:$0xf]
  %v1067 = vld [vmem:[%s6 + $0x7c] sm:$0xf]
  %v1068 = vlaneseq
  %v1069 = vshrl.u32 %v1068, 7
  %v1070 = vsub.s32 1, %v1069
  %v1071 = vrot.slane %v35, %v1070
  %v1104 = vunpack.c.l.b16 %v1036
  %v1105 = vunpack.c.l.b16 %v1037
  %v1106 = vunpack.c.l.b16 %v1038
  %v1107 = vunpack.c.l.b16 %v1039
  %v1108 = vunpack.c.l.b16 %v1040
  %v1109 = vunpack.c.l.b16 %v1041
  %v1110 = vunpack.c.l.b16 %v1042
  %v1111 = vunpack.c.l.b16 %v1043
  %v1112 = vunpack.c.l.b16 %v1044
  %v1113 = vunpack.c.l.b16 %v1045
  %v1114 = vunpack.c.l.b16 %v1046
  %v1115 = vunpack.c.l.b16 %v1047
  %v1116 = vunpack.c.l.b16 %v1048
  %v1117 = vunpack.c.l.b16 %v1049
  %v1118 = vunpack.c.l.b16 %v1050
  %v1119 = vunpack.c.l.b16 %v1051
  %v1120 = vunpack.c.l.b16 %v1052
  %v1121 = vunpack.c.l.b16 %v1053
  %v1122 = vunpack.c.l.b16 %v1054
  %v1123 = vunpack.c.l.b16 %v1055
  %v1124 = vunpack.c.l.b16 %v1056
  %v1125 = vunpack.c.l.b16 %v1057
  %v1126 = vunpack.c.l.b16 %v1058
  %v1127 = vunpack.c.l.b16 %v1059
  %v1128 = vunpack.c.l.b16 %v1060
  %v1129 = vunpack.c.l.b16 %v1061
  %v1130 = vunpack.c.l.b16 %v1062
  %v1131 = vunpack.c.l.b16 %v1063
  %v1132 = vunpack.c.l.b16 %v1064
  %v1133 = vunpack.c.l.b16 %v1065
  %v1134 = vunpack.c.l.b16 %v1066
  %v1135 = vunpack.c.l.b16 %v1067
  %v1136 = vpack.c.b16 %v1105, %v1104
  %v1137 = vpack.c.b16 %v1107, %v1106
  %v1138 = vpack.c.b16 %v1109, %v1108
  %v1139 = vpack.c.b16 %v1111, %v1110
  %v1140 = vpack.c.b16 %v1113, %v1112
  %v1141 = vpack.c.b16 %v1115, %v1114
  %v1142 = vpack.c.b16 %v1117, %v1116
  %v1143 = vpack.c.b16 %v1119, %v1118
  %v1144 = vpack.c.b16 %v1121, %v1120
  %v1145 = vpack.c.b16 %v1123, %v1122
  %v1146 = vpack.c.b16 %v1125, %v1124
  %v1147 = vpack.c.b16 %v1127, %v1126
  %v1148 = vpack.c.b16 %v1129, %v1128
  %v1149 = vpack.c.b16 %v1131, %v1130
  %v1150 = vpack.c.b16 %v1133, %v1132
  %v1151 = vpack.c.b16 %v1135, %v1134
  %1168 = vmatprep.subr.bf16.mxu0 0
  %1169 = vmatpush1.bf16.msra.mxu0 %v1136
  %1170 = vmatprep.subr.bf16.mxu0 0
  %1171 = vmatpush1.bf16.msra.mxu0 %v1137
  %1172 = vmatprep.subr.bf16.mxu0 0
  %1173 = vmatpush1.bf16.msra.mxu0 %v1138
  %1174 = vmatprep.subr.bf16.mxu0 0
  %1175 = vmatpush1.bf16.msra.mxu0 %v1139
  %1176 = vmatprep.subr.bf16.mxu0 0
  %1177 = vmatpush1.bf16.msra.mxu0 %v1140
  %1178 = vmatprep.subr.bf16.mxu0 0
  %1179 = vmatpush1.bf16.msra.mxu0 %v1141
  %1180 = vmatprep.subr.bf16.mxu0 0
  %1181 = vmatpush1.bf16.msra.mxu0 %v1142
  %1182 = vmatprep.subr.bf16.mxu0 0
  %1183 = vmatpush1.bf16.msra.mxu0 %v1143
  %1184 = vmatprep.subr.bf16.mxu0 0
  %1185 = vmatpush1.bf16.msra.mxu0 %v1144
  %1186 = vmatprep.subr.bf16.mxu0 0
  %1187 = vmatpush1.bf16.msra.mxu0 %v1145
  %1188 = vmatprep.subr.bf16.mxu0 0
  %1189 = vmatpush1.bf16.msra.mxu0 %v1146
  %1190 = vmatprep.subr.bf16.mxu0 0
  %1191 = vmatpush1.bf16.msra.mxu0 %v1147
  %1192 = vmatprep.subr.bf16.mxu0 0
  %1193 = vmatpush1.bf16.msra.mxu0 %v1148
  %1194 = vmatprep.subr.bf16.mxu0 0
  %1195 = vmatpush1.bf16.msra.mxu0 %v1149
  %1196 = vmatprep.subr.bf16.mxu0 0
  %1197 = vmatpush1.bf16.msra.mxu0 %v1150
  %1198 = vmatprep.subr.bf16.mxu0 0
  %1199 = vmatpush1.bf16.msra.mxu0 %v1151
  %1200 = vmatprep.mubr.bf16.mxu0 %v1035
  %1201 = vmatmul.mubr.bf16.gmra.mrb[0].mxu0 %v1034
  %v1202 = vpop.f32.mrb[0].mxu0
  %v1203 = vadd.f32 %v1071, %v1202
  %v1204 = vpop.f32.mrb[0].mxu0
  %v1205 = vpop.f32.mrb[0].mxu0
  %v1206 = vpop.f32.mrb[0].mxu0
  %1207 = vdwg.mxu0
  %1208 = vst [vmem:[%s9] sm:$0xff] %v1203
  // Predicated region
  $region38: #{ddpm_forward.1} parent=0 // pred_check
    _
  $region39: #{ddpm_forward.1} parent=0 // pred_check_branch
    %1210 = sbr.rel (0) target = $region41
  $region40: #{ddpm_forward.1} parent=0 // pred_region
    _
  $region41: #{ddpm_forward.1} parent=0 // pred_fallthru
    _
  // Predicated region
  $region42: #{ddpm_forward.1} parent=0 // pred_check
    _
  $region43: #{ddpm_forward.1} parent=0 // pred_check_branch
    %1212 = sbr.rel (0) target = $region45
  $region44: #{ddpm_forward.1} parent=0 // pred_region
    _
  $region45: #{ddpm_forward.1} parent=0 // pred_fallthru
    _

</llo_original>
